<compile_context>
chip_gen: v7x
topology: tpu7x:2x2x1
jax: 0.10.0
libtpu: 0.0.40
codegen_flags: <defaults>
</compile_context>

<pallas_src>
import jax
import jax.numpy as jnp
from jax.experimental import pallas as pl
from jax.experimental.pallas import tpu as pltpu


def _make_kernel(num_layers, n_mlp):
    """Kernel body for a fixed readout structure (num_layers, MLP depth)."""
    num_linear = num_layers - 1

    def kernel(*refs):
        idx = 0
        feat_refs = refs[idx:idx + num_layers]          # each (in_f, TA)
        idx += num_layers
        if num_linear > 0:
            w_lin_ref = refs[idx]                       # (L-1, in_f)
            idx += 1
        mlp_refs = refs[idx:idx + 2 * n_mlp]            # (W_k, b_k) pairs
        idx += 2 * n_mlp
        scale_ref = refs[idx]                           # (1, TA)
        shift_ref = refs[idx + 1]                       # (1, TA)
        v_ref = refs[idx + 2]                           # (1, TA) per-atom energy out

        # --- MLP branch on the last layer's features (atoms stay on lanes). ---
        # TODO(synk): camp MLP hidden activation not shown in the module; SiLU assumed.
        h = feat_refs[-1][...]                          # (in_f, TA)
        for k in range(n_mlp):
            W = mlp_refs[2 * k][...]                    # (d_out, d_in)
            b = mlp_refs[2 * k + 1][...]                # (d_out, 1)
            h = jnp.dot(W, h, preferred_element_type=jnp.float32) + b
            if k < n_mlp - 1:
                h = jax.nn.silu(h)
        V = h                                           # (1, TA) f32

        # --- Plain Linear(in_features, 1) readouts of the first L-1 layers. ---
        # (their biases were folded into the MLP output bias in the wrapper)
        if num_linear > 0:
            wl = w_lin_ref[...]                         # (L-1, in_f)
            for l in range(num_linear):
                V = V + jnp.dot(wl[l:l + 1, :], feat_refs[l][...],
                                preferred_element_type=jnp.float32)

        # --- Per-atom-type scale / shift (gathered to per-atom arrays outside). ---
        v_ref[...] = (V * scale_ref[...] + shift_ref[...]).astype(v_ref.dtype)

    return kernel


def total_energy(atom_feats, w_lin, b_lin, mlp_ws, mlp_bs,
                 scale_per_atom, shift_per_atom, seg_ids, n_config,
                 tile_atoms=2048, compute_dtype=jnp.float32):
    """Pallas implementation of TotalEnergy.forward.

    atom_feats: list (len num_layers) of (in_features, n_atoms) float32 arrays.
    w_lin / b_lin: lists (len num_layers-1) of (in_features,) weights and () biases.
    mlp_ws / mlp_bs: MLP params, torch.nn.Linear convention (d_out, d_in) / (d_out,).
    scale_per_atom / shift_per_atom: (n_atoms,) already gathered by atom_type.
    seg_ids: (n_atoms,) int32 configuration id per atom.
    compute_dtype: dtype of the feature/weight HBM stream (bf16 halves HBM traffic
        on this memory-bound kernel; f32 accumulation is kept either way).
    Returns: (n_config,) float32 total energies.
    """
    num_layers = len(atom_feats)
    num_linear = num_layers - 1
    in_f, n_atoms = atom_feats[0].shape
    n_mlp = len(mlp_ws)

    # Lane-dense tile (multiple of 128), no bigger than the padded atom count.
    ta = max(128, min(int(tile_atoms), pl.cdiv(n_atoms, 128) * 128))
    n_pad = pl.cdiv(n_atoms, ta) * ta
    grid = (n_pad // ta,)

    def pad_atoms(x):
        return jnp.pad(x, [(0, 0)] * (x.ndim - 1) + [(0, n_pad - n_atoms)])

    inputs, in_specs = [], []

    # Per-layer features, each its own input (no HBM stack copy, no in-kernel reshape).
    for f in atom_feats:
        inputs.append(pad_atoms(f).astype(compute_dtype))
        in_specs.append(pl.BlockSpec((in_f, ta), lambda i: (0, i)))

    # Stacked linear-readout weights (tiny, resident every step).
    if num_linear > 0:
        w_lin_stk = jnp.stack([w.reshape(in_f) for w in w_lin], axis=0)
        inputs.append(w_lin_stk.astype(compute_dtype))
        in_specs.append(pl.BlockSpec((num_linear, in_f), lambda i: (0, 0)))
        b_lin_sum = jnp.sum(jnp.stack(b_lin)).astype(jnp.float32)
    else:
        b_lin_sum = jnp.float32(0.0)

    # MLP params; fold the summed linear biases into the output-layer bias.
    for k, (W, b) in enumerate(zip(mlp_ws, mlp_bs)):
        b_eff = b + (b_lin_sum if k == n_mlp - 1 else 0.0)
        inputs += [W.astype(compute_dtype),
                   b_eff.reshape(-1, 1).astype(jnp.float32)]
        in_specs += [pl.BlockSpec(W.shape, lambda i: (0, 0)),
                     pl.BlockSpec((b.shape[0], 1), lambda i: (0, 0))]

    # Per-atom scale / shift, lane-major; pad region gets scale=shift=0.
    inputs += [pad_atoms(scale_per_atom.reshape(1, n_atoms).astype(jnp.float32)),
               pad_atoms(shift_per_atom.reshape(1, n_atoms).astype(jnp.float32))]
    in_specs += [pl.BlockSpec((1, ta), lambda i: (0, i)),
                 pl.BlockSpec((1, ta), lambda i: (0, i))]

    # Scoped VMEM: double-buffered per-atom streams + headroom, capped for v7x (64 MiB phys).
    itemsize = jnp.dtype(compute_dtype).itemsize
    per_tile_bytes = (num_layers * in_f * itemsize + 3 * 4) * ta
    vmem_limit = int(min(max(4 * per_tile_bytes + (4 << 20), 32 << 20), 48 << 20))

    kernel = _make_kernel(num_layers, n_mlp)
    v_atom = pl.pallas_call(
        kernel,
        out_shape=jax.ShapeDtypeStruct((1, n_pad), jnp.float32),
        grid=grid,
        in_specs=in_specs,
        out_specs=pl.BlockSpec((1, ta), lambda i: (0, i)),
        compiler_params=pltpu.CompilerParams(
            dimension_semantics=("parallel",),   # no cross-grid accumulator -> safe to shard
            vmem_limit_bytes=vmem_limit),
    )(*inputs)

    # Segment-sum over configurations (glue, like the type-gather) in plain JAX;
    # this scales to any n_config without a (TA, n_config) one-hot in VMEM.
    V = v_atom[0, :n_atoms]
    E = jax.ops.segment_sum(V, seg_ids, num_segments=n_config)
    return E


if __name__ == "__main__":
    key = jax.random.PRNGKey(0)

    num_layers = 3
    in_features = 32
    hidden_features = [32, 32]
    num_atoms = jnp.array([80, 100, 50, 70], dtype=jnp.int32)   # sums to 300
    n_atoms = 300                                               # not a multiple of 128
    n_types = 5
    n_config = int(num_atoms.shape[0])

    keys = iter(jax.random.split(key, 32))

    # Inputs: per-layer scalar atomic features, shape (n_u=in_features, n_atoms).
    atom_feats = [jax.random.normal(next(keys), (in_features, n_atoms), jnp.float32)
                  for _ in range(num_layers)]

    # (num_layers - 1) x nn.Linear(in_features, 1)
    w_lin = [0.1 * jax.random.normal(next(keys), (in_features,), jnp.float32)
             for _ in range(num_layers - 1)]
    b_lin = [0.01 * jax.random.normal(next(keys), (), jnp.float32)
             for _ in range(num_layers - 1)]
    # MLP(in_features -> hidden_features... -> 1), no output activation.
    dims = [in_features] + hidden_features + [1]
    mlp_ws, mlp_bs = [], []
    for d_in, d_out in zip(dims[:-1], dims[1:]):
        mlp_ws.append((1.0 / jnp.sqrt(d_in)) *
                      jax.random.normal(next(keys), (d_out, d_in), jnp.float32))
        mlp_bs.append(0.01 * jax.random.normal(next(keys), (d_out,), jnp.float32))

    atom_type = jax.random.randint(next(keys), (n_atoms,), 0, n_types, dtype=jnp.int32)
    atomic_energy_scale = 1.0 + 0.1 * jax.random.normal(next(keys), (n_types,), jnp.float32)
    atomic_energy_shift = 0.5 * jax.random.normal(next(keys), (n_types,), jnp.float32)

    # Glue (plain JAX): gather per-atom scale/shift, build segment ids
    # (equivalent of torch.repeat_interleave(num_atoms)).
    scale_per_atom = atomic_energy_scale[atom_type]
    shift_per_atom = atomic_energy_shift[atom_type]
    seg_ids = jnp.repeat(jnp.arange(n_config, dtype=jnp.int32), num_atoms,
                         total_repeat_length=n_atoms)

    # Small tile for the tiny demo so the multi-tile + padded-atom path is
    # exercised; real workloads should use the default tile_atoms=2048.
    E = total_energy(atom_feats, w_lin, b_lin, mlp_ws, mlp_bs,
                     scale_per_atom, shift_per_atom, seg_ids, n_config,
                     tile_atoms=128)
    E = jax.block_until_ready(E)

    # Pure-JAX reference for correctness.
    V = jnp.zeros((n_atoms,), jnp.float32)
    for i in range(num_layers - 1):
        V = V + atom_feats[i].T @ w_lin[i] + b_lin[i]
    x = atom_feats[-1].T
    for k, (W, b) in enumerate(zip(mlp_ws, mlp_bs)):
        x = x @ W.T + b
        if k < len(mlp_ws) - 1:
            x = jax.nn.silu(x)
    V = V + x[:, 0]
    V = V * scale_per_atom + shift_per_atom
    E_ref = jax.ops.segment_sum(V, seg_ids, num_segments=n_config)

    assert jnp.allclose(E, E_ref, rtol=1e-4, atol=1e-4), (E, E_ref)
    print("KERNEL_OK")
</pallas_src>

<mosaic_0001>
module attributes {stable_mosaic.version = 11 : i64} {
  func.func @kernel(%arg0: i32, %arg1: memref<32x128xf32, #tpu.memory_space<vmem>>, %arg2: memref<32x128xf32, #tpu.memory_space<vmem>>, %arg3: memref<32x128xf32, #tpu.memory_space<vmem>>, %arg4: memref<2x32xf32, #tpu.memory_space<vmem>>, %arg5: memref<32x32xf32, #tpu.memory_space<vmem>>, %arg6: memref<32x1xf32, #tpu.memory_space<vmem>>, %arg7: memref<32x32xf32, #tpu.memory_space<vmem>>, %arg8: memref<32x1xf32, #tpu.memory_space<vmem>>, %arg9: memref<1x32xf32, #tpu.memory_space<vmem>>, %arg10: memref<1x1xf32, #tpu.memory_space<vmem>>, %arg11: memref<1x128xf32, #tpu.memory_space<vmem>>, %arg12: memref<1x128xf32, #tpu.memory_space<vmem>>, %arg13: memref<1x128xf32, #tpu.memory_space<vmem>>) attributes {dimension_semantics = [#tpu.dimension_semantics<parallel>], iteration_bounds = array<i64: 3>, scalar_prefetch = 0 : i64, scratch_operands = 0 : i64, tpu.core_type = #tpu.core_type<tc>, window_params = [{transform_indices = @transform_0, window_bounds = array<i64: 32, 128>}, {transform_indices = @transform_1, window_bounds = array<i64: 32, 128>}, {transform_indices = @transform_2, window_bounds = array<i64: 32, 128>}, {pipeline_mode = #tpu.pipeline_mode<synchronous>, transform_indices = @transform_3, window_bounds = array<i64: 2, 32>}, {pipeline_mode = #tpu.pipeline_mode<synchronous>, transform_indices = @transform_4, window_bounds = array<i64: 32, 32>}, {pipeline_mode = #tpu.pipeline_mode<synchronous>, transform_indices = @transform_5, window_bounds = array<i64: 32, 1>}, {pipeline_mode = #tpu.pipeline_mode<synchronous>, transform_indices = @transform_6, window_bounds = array<i64: 32, 32>}, {pipeline_mode = #tpu.pipeline_mode<synchronous>, transform_indices = @transform_7, window_bounds = array<i64: 32, 1>}, {pipeline_mode = #tpu.pipeline_mode<synchronous>, transform_indices = @transform_8, window_bounds = array<i64: 1, 32>}, {pipeline_mode = #tpu.pipeline_mode<synchronous>, transform_indices = @transform_9, window_bounds = array<i64: 1, 1>}, {transform_indices = @transform_10, window_bounds = array<i64: 1, 128>}, {transform_indices = @transform_11, window_bounds = array<i64: 1, 128>}, {transform_indices = @transform_12, window_bounds = array<i64: 1, 128>}]} {
    %c0 = arith.constant 0 : index
    %c0_0 = arith.constant 0 : index
    %0 = vector.load %arg3[%c0, %c0_0] : memref<32x128xf32, #tpu.memory_space<vmem>>, vector<32x128xf32>
    %c0_1 = arith.constant 0 : index
    %c0_2 = arith.constant 0 : index
    %1 = vector.load %arg5[%c0_1, %c0_2] : memref<32x32xf32, #tpu.memory_space<vmem>>, vector<32x32xf32>
    %c0_3 = arith.constant 0 : index
    %c0_4 = arith.constant 0 : index
    %2 = vector.load %arg6[%c0_3, %c0_4] : memref<32x1xf32, #tpu.memory_space<vmem>>, vector<32x1xf32>
    %cst = arith.constant dense<0.000000e+00> : vector<32x128xf32>
    %3 = tpu.matmul %1, %0, %cst {dimension_numbers = #tpu.dot_dimension_numbers<[1], [0], [0], [1], [0, 0, 1, 1], [], []>} : vector<32x32xf32>, vector<32x128xf32>, vector<32x128xf32> -> vector<32x128xf32>
    %4 = vector.broadcast %2 : vector<32x1xf32> to vector<32x128xf32>
    %5 = arith.addf %3, %4 : vector<32x128xf32>
    %6 = arith.negf %5 : vector<32x128xf32>
    %7 = math.exp %6 : vector<32x128xf32>
    %cst_5 = arith.constant 1.000000e+00 : f32
    %8 = vector.broadcast %cst_5 : f32 to vector<32x128xf32>
    %9 = arith.addf %8, %7 : vector<32x128xf32>
    %10 = arith.divf %8, %9 : vector<32x128xf32>
    %11 = arith.mulf %5, %10 : vector<32x128xf32>
    %c0_6 = arith.constant 0 : index
    %c0_7 = arith.constant 0 : index
    %12 = vector.load %arg7[%c0_6, %c0_7] : memref<32x32xf32, #tpu.memory_space<vmem>>, vector<32x32xf32>
    %c0_8 = arith.constant 0 : index
    %c0_9 = arith.constant 0 : index
    %13 = vector.load %arg8[%c0_8, %c0_9] : memref<32x1xf32, #tpu.memory_space<vmem>>, vector<32x1xf32>
    %cst_10 = arith.constant dense<0.000000e+00> : vector<32x128xf32>
    %14 = tpu.matmul %12, %11, %cst_10 {dimension_numbers = #tpu.dot_dimension_numbers<[1], [0], [0], [1], [0, 0, 1, 1], [], []>} : vector<32x32xf32>, vector<32x128xf32>, vector<32x128xf32> -> vector<32x128xf32>
    %15 = vector.broadcast %13 : vector<32x1xf32> to vector<32x128xf32>
    %16 = arith.addf %14, %15 : vector<32x128xf32>
    %17 = arith.negf %16 : vector<32x128xf32>
    %18 = math.exp %17 : vector<32x128xf32>
    %cst_11 = arith.constant 1.000000e+00 : f32
    %19 = vector.broadcast %cst_11 : f32 to vector<32x128xf32>
    %20 = arith.addf %19, %18 : vector<32x128xf32>
    %21 = arith.divf %19, %20 : vector<32x128xf32>
    %22 = arith.mulf %16, %21 : vector<32x128xf32>
    %c0_12 = arith.constant 0 : index
    %c0_13 = arith.constant 0 : index
    %23 = vector.load %arg9[%c0_12, %c0_13] : memref<1x32xf32, #tpu.memory_space<vmem>>, vector<1x32xf32>
    %c0_14 = arith.constant 0 : index
    %c0_15 = arith.constant 0 : index
    %24 = vector.load %arg10[%c0_14, %c0_15] : memref<1x1xf32, #tpu.memory_space<vmem>>, vector<1x1xf32>
    %cst_16 = arith.constant dense<0.000000e+00> : vector<1x128xf32>
    %25 = tpu.matmul %23, %22, %cst_16 {dimension_numbers = #tpu.dot_dimension_numbers<[1], [0], [0], [1], [0, 0, 1, 1], [], []>} : vector<1x32xf32>, vector<32x128xf32>, vector<1x128xf32> -> vector<1x128xf32>
    %26 = vector.broadcast %24 : vector<1x1xf32> to vector<1x128xf32>
    %27 = arith.addf %25, %26 : vector<1x128xf32>
    %c0_17 = arith.constant 0 : index
    %c0_18 = arith.constant 0 : index
    %28 = vector.load %arg4[%c0_17, %c0_18] : memref<2x32xf32, #tpu.memory_space<vmem>>, vector<2x32xf32>
    %29 = vector.extract_strided_slice %28 {offsets = [0, 0], sizes = [1, 32], strides = [1, 1]} : vector<2x32xf32> to vector<1x32xf32>
    %c0_19 = arith.constant 0 : index
    %c0_20 = arith.constant 0 : index
    %30 = vector.load %arg1[%c0_19, %c0_20] : memref<32x128xf32, #tpu.memory_space<vmem>>, vector<32x128xf32>
    %cst_21 = arith.constant dense<0.000000e+00> : vector<1x128xf32>
    %31 = tpu.matmul %29, %30, %cst_21 {dimension_numbers = #tpu.dot_dimension_numbers<[1], [0], [0], [1], [0, 0, 1, 1], [], []>} : vector<1x32xf32>, vector<32x128xf32>, vector<1x128xf32> -> vector<1x128xf32>
    %32 = arith.addf %27, %31 : vector<1x128xf32>
    %33 = vector.extract_strided_slice %28 {offsets = [1, 0], sizes = [1, 32], strides = [1, 1]} : vector<2x32xf32> to vector<1x32xf32>
    %c0_22 = arith.constant 0 : index
    %c0_23 = arith.constant 0 : index
    %34 = vector.load %arg2[%c0_22, %c0_23] : memref<32x128xf32, #tpu.memory_space<vmem>>, vector<32x128xf32>
    %cst_24 = arith.constant dense<0.000000e+00> : vector<1x128xf32>
    %35 = tpu.matmul %33, %34, %cst_24 {dimension_numbers = #tpu.dot_dimension_numbers<[1], [0], [0], [1], [0, 0, 1, 1], [], []>} : vector<1x32xf32>, vector<32x128xf32>, vector<1x128xf32> -> vector<1x128xf32>
    %36 = arith.addf %32, %35 : vector<1x128xf32>
    %c0_25 = arith.constant 0 : index
    %c0_26 = arith.constant 0 : index
    %37 = vector.load %arg11[%c0_25, %c0_26] : memref<1x128xf32, #tpu.memory_space<vmem>>, vector<1x128xf32>
    %38 = arith.mulf %36, %37 : vector<1x128xf32>
    %c0_27 = arith.constant 0 : index
    %c0_28 = arith.constant 0 : index
    %39 = vector.load %arg12[%c0_27, %c0_28] : memref<1x128xf32, #tpu.memory_space<vmem>>, vector<1x128xf32>
    %40 = arith.addf %38, %39 : vector<1x128xf32>
    %c0_29 = arith.constant 0 : index
    %c0_30 = arith.constant 0 : index
    %41 = vector.load %arg13[%c0_29, %c0_30] : memref<1x128xf32, #tpu.memory_space<vmem>>, vector<1x128xf32>
    tpu.vector_store %arg13[%c0_29, %c0_30], %40 {strides = array<i32>} : memref<1x128xf32, #tpu.memory_space<vmem>>, vector<1x128xf32>,
    return
  }
  func.func @transform_0(%arg0: i32) -> (i32, i32) {
    %c0_i32 = arith.constant 0 : i32
    %c0_i32_0 = arith.constant 0 : i32
    return %c0_i32, %arg0 : i32, i32
  }
  func.func @transform_1(%arg0: i32) -> (i32, i32) {
    %c0_i32 = arith.constant 0 : i32
    %c0_i32_0 = arith.constant 0 : i32
    return %c0_i32, %arg0 : i32, i32
  }
  func.func @transform_2(%arg0: i32) -> (i32, i32) {
    %c0_i32 = arith.constant 0 : i32
    %c0_i32_0 = arith.constant 0 : i32
    return %c0_i32, %arg0 : i32, i32
  }
  func.func @transform_3(%arg0: i32) -> (i32, i32) {
    %c0_i32 = arith.constant 0 : i32
    %c0_i32_0 = arith.constant 0 : i32
    %c0_i32_1 = arith.constant 0 : i32
    return %c0_i32, %c0_i32_0 : i32, i32
  }
  func.func @transform_4(%arg0: i32) -> (i32, i32) {
    %c0_i32 = arith.constant 0 : i32
    %c0_i32_0 = arith.constant 0 : i32
    %c0_i32_1 = arith.constant 0 : i32
    return %c0_i32, %c0_i32_0 : i32, i32
  }
  func.func @transform_5(%arg0: i32) -> (i32, i32) {
    %c0_i32 = arith.constant 0 : i32
    %c0_i32_0 = arith.constant 0 : i32
    %c0_i32_1 = arith.constant 0 : i32
    return %c0_i32, %c0_i32_0 : i32, i32
  }
  func.func @transform_6(%arg0: i32) -> (i32, i32) {
    %c0_i32 = arith.constant 0 : i32
    %c0_i32_0 = arith.constant 0 : i32
    %c0_i32_1 = arith.constant 0 : i32
    return %c0_i32, %c0_i32_0 : i32, i32
  }
  func.func @transform_7(%arg0: i32) -> (i32, i32) {
    %c0_i32 = arith.constant 0 : i32
    %c0_i32_0 = arith.constant 0 : i32
    %c0_i32_1 = arith.constant 0 : i32
    return %c0_i32, %c0_i32_0 : i32, i32
  }
  func.func @transform_8(%arg0: i32) -> (i32, i32) {
    %c0_i32 = arith.constant 0 : i32
    %c0_i32_0 = arith.constant 0 : i32
    %c0_i32_1 = arith.constant 0 : i32
    return %c0_i32, %c0_i32_0 : i32, i32
  }
  func.func @transform_9(%arg0: i32) -> (i32, i32) {
    %c0_i32 = arith.constant 0 : i32
    %c0_i32_0 = arith.constant 0 : i32
    %c0_i32_1 = arith.constant 0 : i32
    return %c0_i32, %c0_i32_0 : i32, i32
  }
  func.func @transform_10(%arg0: i32) -> (i32, i32) {
    %c0_i32 = arith.constant 0 : i32
    %c0_i32_0 = arith.constant 0 : i32
    return %c0_i32, %arg0 : i32, i32
  }
  func.func @transform_11(%arg0: i32) -> (i32, i32) {
    %c0_i32 = arith.constant 0 : i32
    %c0_i32_0 = arith.constant 0 : i32
    return %c0_i32, %arg0 : i32, i32
  }
  func.func @transform_12(%arg0: i32) -> (i32, i32) {
    %c0_i32 = arith.constant 0 : i32
    %c0_i32_0 = arith.constant 0 : i32
    return %c0_i32, %arg0 : i32, i32
  }
}

</mosaic_0001>

<llo_original>
// kernel: tpu_custom_call.1
$region0: #{tpu_custom_call.1}
  #allocation0 [shape = 'u32[]', space=smem, size = 0x4, offset = 0x4, fixed_abs, tag = 'smem constant byte address 0x4 - core index']
  #allocation1 [shape = 'u32[144,128]{1,0:T(1,128)}', space=vmem, size = 0x12000, scoped, tag = 'internal scratch']
  #allocation2 [shape = 'f32[1,1]{1,0:T(1,128)S(1)}', space=vmem, size = 0x200, scoped, tag = 'scoped memory for tpu_custom_call.1']
  %s0 = inlined_call_operand.hbm [shape: f32[32,384], index: 0, kind: input, shape index: {}]
  %s1 = inlined_call_operand.hbm [shape: f32[32,384], index: 1, kind: input, shape index: {}]
  %s2 = inlined_call_operand.hbm [shape: f32[32,384], index: 2, kind: input, shape index: {}]
  %s3 = inlined_call_operand.vmem [shape: f32[2,32], index: 3, kind: input, shape index: {}]
  %s4 = inlined_call_operand.vmem [shape: f32[32,32], index: 4, kind: input, shape index: {}]
  %s5 = inlined_call_operand.vmem [shape: f32[32,1], index: 5, kind: input, shape index: {}]
  %s6 = inlined_call_operand.vmem [shape: f32[32,32], index: 6, kind: input, shape index: {}]
  %s7 = inlined_call_operand.vmem [shape: f32[32,1], index: 7, kind: input, shape index: {}]
  %s8 = inlined_call_operand.vmem [shape: f32[1,32], index: 8, kind: input, shape index: {}]
  %s9 = inlined_call_operand.<no memory space> [shape: f32[1,1], index: 9, kind: input, shape index: {}]
  %s10 = inlined_call_operand.vmem [shape: f32[1,384], index: 10, kind: input, shape index: {}]
  %s11 = inlined_call_operand.vmem [shape: f32[1,384], index: 11, kind: input, shape index: {}]
  %s12 = inlined_call_operand.hbm [shape: f32[1,384], index: 12, kind: output, shape index: {}]
  %s13 = sld [smem:[#allocation0]]
  $region93: #{tpu_custom_call.1} parent=0
    _
  %s15 = ssub.s32 1, %s13
  %s16 = scalar_select 0, %s15, %s13
  %v17 = vstv %s9
  %18 = vst [vmem:[#allocation2] sm:$0x1] %v17
  $region1: #{tpu_custom_call.1} parent=0
    #allocation3 [shape = 'u8[32768]{0}', space=vmem, size = 0x8000, scoped, tag = 'input window, operand 0']
    #allocation4 [shape = 's32[2]{0}', space=sflag, size = 0x8, scoped, tag = 'scoped memory for tpu_custom_call.1']
    #allocation5 [shape = 's32[2]{0}', space=sflag, size = 0x8, scoped, tag = 'scoped memory for tpu_custom_call.1']
    #allocation6 [shape = 'u8[32768]{0}', space=vmem, size = 0x8000, scoped, tag = 'input window, operand 1']
    #allocation7 [shape = 's32[2]{0}', space=sflag, size = 0x8, scoped, tag = 'scoped memory for tpu_custom_call.1']
    #allocation8 [shape = 'u8[32768]{0}', space=vmem, size = 0x8000, scoped, tag = 'input window, operand 2']
    #allocation9 [shape = 'u8[1024]{0}', space=vmem, size = 0x400, scoped, tag = 'output window, operand 0']
    %19 = vsyncpa [#allocation4], 0
    %s20 = scalar_lea.sflag [#allocation4], 1
    %21 = vsyncpa %s20, 0
    %22 = vsyncpa [#allocation7], 0
    %s23 = scalar_lea.sflag [#allocation7], 1
    %24 = vsyncpa %s23, 0
    %25 = vsyncpa [#allocation5], 0
    %s26 = scalar_lea.sflag [#allocation5], 1
    %27 = vsyncpa %s26, 0
    loop: start=0, step=1, limit=5
    $region2: #{tpu_custom_call.1} parent=1 // loop_pre_header
      _
    $region3: #{tpu_custom_call.1} parent=1 // loop_header
      %s29 = sphi 0, %s33
      %p30 = scmp.ge.s32.totalorder %s29, 5
      %s39 = sphi 0, %s41
      %s42 = sphi 0, %s39
      %s43 = sphi 0, %s42
      %s59 = sphi 0, %s43
      %s65 = sphi 0, %s67
      %s68 = sphi 0, %s65
      %s69 = sphi 0, %s68
      %s85 = sphi 0, %s69
      %s91 = sphi 0, %s93
      %s94 = sphi 0, %s91
      %s95 = sphi 0, %s94
      %s111 = sphi 0, %s95
      %s115 = sphi 0, %s115
      %s117 = sphi 0, %s115
      %s118 = sphi 0, %s117
      %s132 = sphi 0, %s118
      %s136 = sphi 0, %s136
      %s138 = sphi 0, %s136
      %s139 = sphi 0, %s138
      %s153 = sphi 0, %s139
      %s157 = sphi 0, %s157
      %s159 = sphi 0, %s157
      %s160 = sphi 0, %s159
      %s174 = sphi 0, %s160
      %s178 = sphi 0, %s178
      %s180 = sphi 0, %s178
      %s181 = sphi 0, %s180
      %s195 = sphi 0, %s181
      %s199 = sphi 0, %s199
      %s201 = sphi 0, %s199
      %s202 = sphi 0, %s201
      %s216 = sphi 0, %s202
      %s220 = sphi 0, %s220
      %s222 = sphi 0, %s220
      %s223 = sphi 0, %s222
      %s237 = sphi 0, %s223
      %s241 = sphi 0, %s241
      %s243 = sphi 0, %s241
      %s244 = sphi 0, %s243
      %s258 = sphi 0, %s244
      %s264 = sphi 0, %s266
      %s267 = sphi 0, %s264
      %s268 = sphi 0, %s267
      %s284 = sphi 0, %s268
      %s290 = sphi 0, %s292
      %s293 = sphi 0, %s290
      %s294 = sphi 0, %s293
      %s310 = sphi 0, %s294
      %s316 = sphi 0, %s318
      %s319 = sphi 0, %s316
      %s320 = sphi 0, %s319
      %s336 = sphi 0, %s320
    $region4: #{tpu_custom_call.1} parent=1 // loop_header_branch
      %32 = sbr.rel (%p30) target = $region8
    $region5: #{tpu_custom_call.1} parent=1 // loop_body
      %s34 = ssub.s32 %s29, 1
      %s35 = ssub.s32 %s29, 2
      %s36 = sadd.s32 %s29, 1
      %s37 = ssub.s32 %s29, %s36
      %p38 = scmp.eq.s32.totalorder %s37, 0
      %s40 = sadd.s32 %s39, 1
      %s41 = scalar_select %p38, %s39, %s40
      %p44 = pneg %p38
      %p45 = scmp.eq.s32.totalorder %s29, 2
      %p46 = por %p44, %p45
      %p47 = scmp.ne.s32.totalorder %s39, %s42
      %p48 = scmp.eq.s32.totalorder %s29, 0
      %p49 = por %p47, %p48
      %p50 = scmp.ne.s32.totalorder %s39, %s42
      %p51 = scmp.eq.s32.totalorder %s34, 2
      %p52 = por %p50, %p51
      %p53 = scmp.ne.s32.totalorder %s42, %s43
      %p54 = scmp.eq.s32.totalorder %s34, 0
      %p55 = por %p53, %p54
      %p56 = scmp.ne.s32.totalorder %s42, %s43
      %p57 = scmp.eq.s32.totalorder %s35, 2
      %p58 = por %p56, %p57
      %p60 = scmp.ne.s32.totalorder %s43, %s59
      %p61 = scmp.eq.s32.totalorder %s35, 0
      %p62 = por %p60, %p61
      %s63 = ssub.s32 %s29, %s36
      %p64 = scmp.eq.s32.totalorder %s63, 0
      %s66 = sadd.s32 %s65, 1
      %s67 = scalar_select %p64, %s65, %s66
      %p70 = pneg %p64
      %p71 = scmp.eq.s32.totalorder %s29, 2
      %p72 = por %p70, %p71
      %p73 = scmp.ne.s32.totalorder %s65, %s68
      %p74 = scmp.eq.s32.totalorder %s29, 0
      %p75 = por %p73, %p74
      %p76 = scmp.ne.s32.totalorder %s65, %s68
      %p77 = scmp.eq.s32.totalorder %s34, 2
      %p78 = por %p76, %p77
      %p79 = scmp.ne.s32.totalorder %s68, %s69
      %p80 = scmp.eq.s32.totalorder %s34, 0
      %p81 = por %p79, %p80
      %p82 = scmp.ne.s32.totalorder %s68, %s69
      %p83 = scmp.eq.s32.totalorder %s35, 2
      %p84 = por %p82, %p83
      %p86 = scmp.ne.s32.totalorder %s69, %s85
      %p87 = scmp.eq.s32.totalorder %s35, 0
      %p88 = por %p86, %p87
      %s89 = ssub.s32 %s29, %s36
      %p90 = scmp.eq.s32.totalorder %s89, 0
      %s92 = sadd.s32 %s91, 1
      %s93 = scalar_select %p90, %s91, %s92
      %p96 = pneg %p90
      %p97 = scmp.eq.s32.totalorder %s29, 2
      %p98 = por %p96, %p97
      %p99 = scmp.ne.s32.totalorder %s91, %s94
      %p100 = scmp.eq.s32.totalorder %s29, 0
      %p101 = por %p99, %p100
      %p102 = scmp.ne.s32.totalorder %s91, %s94
      %p103 = scmp.eq.s32.totalorder %s34, 2
      %p104 = por %p102, %p103
      %p105 = scmp.ne.s32.totalorder %s94, %s95
      %p106 = scmp.eq.s32.totalorder %s34, 0
      %p107 = por %p105, %p106
      %p108 = scmp.ne.s32.totalorder %s94, %s95
      %p109 = scmp.eq.s32.totalorder %s35, 2
      %p110 = por %p108, %p109
      %p112 = scmp.ne.s32.totalorder %s95, %s111
      %p113 = scmp.eq.s32.totalorder %s35, 0
      %p114 = por %p112, %p113
      %s116 = sadd.s32 %s115, 1
      %p119 = scmp.eq.s32.totalorder %s29, 2
      %p120 = scmp.ne.s32.totalorder %s115, %s117
      %p121 = scmp.eq.s32.totalorder %s29, 0
      %p122 = por %p120, %p121
      %p123 = scmp.ne.s32.totalorder %s115, %s117
      %p124 = scmp.eq.s32.totalorder %s34, 2
      %p125 = por %p123, %p124
      %p126 = scmp.ne.s32.totalorder %s117, %s118
      %p127 = scmp.eq.s32.totalorder %s34, 0
      %p128 = por %p126, %p127
      %p129 = scmp.ne.s32.totalorder %s117, %s118
      %p130 = scmp.eq.s32.totalorder %s35, 2
      %p131 = por %p129, %p130
      %p133 = scmp.ne.s32.totalorder %s118, %s132
      %p134 = scmp.eq.s32.totalorder %s35, 0
      %p135 = por %p133, %p134
      %s137 = sadd.s32 %s136, 1
      %p140 = scmp.eq.s32.totalorder %s29, 2
      %p141 = scmp.ne.s32.totalorder %s136, %s138
      %p142 = scmp.eq.s32.totalorder %s29, 0
      %p143 = por %p141, %p142
      %p144 = scmp.ne.s32.totalorder %s136, %s138
      %p145 = scmp.eq.s32.totalorder %s34, 2
      %p146 = por %p144, %p145
      %p147 = scmp.ne.s32.totalorder %s138, %s139
      %p148 = scmp.eq.s32.totalorder %s34, 0
      %p149 = por %p147, %p148
      %p150 = scmp.ne.s32.totalorder %s138, %s139
      %p151 = scmp.eq.s32.totalorder %s35, 2
      %p152 = por %p150, %p151
      %p154 = scmp.ne.s32.totalorder %s139, %s153
      %p155 = scmp.eq.s32.totalorder %s35, 0
      %p156 = por %p154, %p155
      %s158 = sadd.s32 %s157, 1
      %p161 = scmp.eq.s32.totalorder %s29, 2
      %p162 = scmp.ne.s32.totalorder %s157, %s159
      %p163 = scmp.eq.s32.totalorder %s29, 0
      %p164 = por %p162, %p163
      %p165 = scmp.ne.s32.totalorder %s157, %s159
      %p166 = scmp.eq.s32.totalorder %s34, 2
      %p167 = por %p165, %p166
      %p168 = scmp.ne.s32.totalorder %s159, %s160
      %p169 = scmp.eq.s32.totalorder %s34, 0
      %p170 = por %p168, %p169
      %p171 = scmp.ne.s32.totalorder %s159, %s160
      %p172 = scmp.eq.s32.totalorder %s35, 2
      %p173 = por %p171, %p172
      %p175 = scmp.ne.s32.totalorder %s160, %s174
      %p176 = scmp.eq.s32.totalorder %s35, 0
      %p177 = por %p175, %p176
      %s179 = sadd.s32 %s178, 1
      %p182 = scmp.eq.s32.totalorder %s29, 2
      %p183 = scmp.ne.s32.totalorder %s178, %s180
      %p184 = scmp.eq.s32.totalorder %s29, 0
      %p185 = por %p183, %p184
      %p186 = scmp.ne.s32.totalorder %s178, %s180
      %p187 = scmp.eq.s32.totalorder %s34, 2
      %p188 = por %p186, %p187
      %p189 = scmp.ne.s32.totalorder %s180, %s181
      %p190 = scmp.eq.s32.totalorder %s34, 0
      %p191 = por %p189, %p190
      %p192 = scmp.ne.s32.totalorder %s180, %s181
      %p193 = scmp.eq.s32.totalorder %s35, 2
      %p194 = por %p192, %p193
      %p196 = scmp.ne.s32.totalorder %s181, %s195
      %p197 = scmp.eq.s32.totalorder %s35, 0
      %p198 = por %p196, %p197
      %s200 = sadd.s32 %s199, 1
      %p203 = scmp.eq.s32.totalorder %s29, 2
      %p204 = scmp.ne.s32.totalorder %s199, %s201
      %p205 = scmp.eq.s32.totalorder %s29, 0
      %p206 = por %p204, %p205
      %p207 = scmp.ne.s32.totalorder %s199, %s201
      %p208 = scmp.eq.s32.totalorder %s34, 2
      %p209 = por %p207, %p208
      %p210 = scmp.ne.s32.totalorder %s201, %s202
      %p211 = scmp.eq.s32.totalorder %s34, 0
      %p212 = por %p210, %p211
      %p213 = scmp.ne.s32.totalorder %s201, %s202
      %p214 = scmp.eq.s32.totalorder %s35, 2
      %p215 = por %p213, %p214
      %p217 = scmp.ne.s32.totalorder %s202, %s216
      %p218 = scmp.eq.s32.totalorder %s35, 0
      %p219 = por %p217, %p218
      %s221 = sadd.s32 %s220, 1
      %p224 = scmp.eq.s32.totalorder %s29, 2
      %p225 = scmp.ne.s32.totalorder %s220, %s222
      %p226 = scmp.eq.s32.totalorder %s29, 0
      %p227 = por %p225, %p226
      %p228 = scmp.ne.s32.totalorder %s220, %s222
      %p229 = scmp.eq.s32.totalorder %s34, 2
      %p230 = por %p228, %p229
      %p231 = scmp.ne.s32.totalorder %s222, %s223
      %p232 = scmp.eq.s32.totalorder %s34, 0
      %p233 = por %p231, %p232
      %p234 = scmp.ne.s32.totalorder %s222, %s223
      %p235 = scmp.eq.s32.totalorder %s35, 2
      %p236 = por %p234, %p235
      %p238 = scmp.ne.s32.totalorder %s223, %s237
      %p239 = scmp.eq.s32.totalorder %s35, 0
      %p240 = por %p238, %p239
      %s242 = sadd.s32 %s241, 1
      %p245 = scmp.eq.s32.totalorder %s29, 2
      %p246 = scmp.ne.s32.totalorder %s241, %s243
      %p247 = scmp.eq.s32.totalorder %s29, 0
      %p248 = por %p246, %p247
      %p249 = scmp.ne.s32.totalorder %s241, %s243
      %p250 = scmp.eq.s32.totalorder %s34, 2
      %p251 = por %p249, %p250
      %p252 = scmp.ne.s32.totalorder %s243, %s244
      %p253 = scmp.eq.s32.totalorder %s34, 0
      %p254 = por %p252, %p253
      %p255 = scmp.ne.s32.totalorder %s243, %s244
      %p256 = scmp.eq.s32.totalorder %s35, 2
      %p257 = por %p255, %p256
      %p259 = scmp.ne.s32.totalorder %s244, %s258
      %p260 = scmp.eq.s32.totalorder %s35, 0
      %p261 = por %p259, %p260
      %s262 = ssub.s32 %s29, %s36
      %p263 = scmp.eq.s32.totalorder %s262, 0
      %s265 = sadd.s32 %s264, 1
      %s266 = scalar_select %p263, %s264, %s265
      %p269 = pneg %p263
      %p270 = scmp.eq.s32.totalorder %s29, 2
      %p271 = por %p269, %p270
      %p272 = scmp.ne.s32.totalorder %s264, %s267
      %p273 = scmp.eq.s32.totalorder %s29, 0
      %p274 = por %p272, %p273
      %p275 = scmp.ne.s32.totalorder %s264, %s267
      %p276 = scmp.eq.s32.totalorder %s34, 2
      %p277 = por %p275, %p276
      %p278 = scmp.ne.s32.totalorder %s267, %s268
      %p279 = scmp.eq.s32.totalorder %s34, 0
      %p280 = por %p278, %p279
      %p281 = scmp.ne.s32.totalorder %s267, %s268
      %p282 = scmp.eq.s32.totalorder %s35, 2
      %p283 = por %p281, %p282
      %p285 = scmp.ne.s32.totalorder %s268, %s284
      %p286 = scmp.eq.s32.totalorder %s35, 0
      %p287 = por %p285, %p286
      %s288 = ssub.s32 %s29, %s36
      %p289 = scmp.eq.s32.totalorder %s288, 0
      %s291 = sadd.s32 %s290, 1
      %s292 = scalar_select %p289, %s290, %s291
      %p295 = pneg %p289
      %p296 = scmp.eq.s32.totalorder %s29, 2
      %p297 = por %p295, %p296
      %p298 = scmp.ne.s32.totalorder %s290, %s293
      %p299 = scmp.eq.s32.totalorder %s29, 0
      %p300 = por %p298, %p299
      %p301 = scmp.ne.s32.totalorder %s290, %s293
      %p302 = scmp.eq.s32.totalorder %s34, 2
      %p303 = por %p301, %p302
      %p304 = scmp.ne.s32.totalorder %s293, %s294
      %p305 = scmp.eq.s32.totalorder %s34, 0
      %p306 = por %p304, %p305
      %p307 = scmp.ne.s32.totalorder %s293, %s294
      %p308 = scmp.eq.s32.totalorder %s35, 2
      %p309 = por %p307, %p308
      %p311 = scmp.ne.s32.totalorder %s294, %s310
      %p312 = scmp.eq.s32.totalorder %s35, 0
      %p313 = por %p311, %p312
      %s314 = ssub.s32 %s29, %s36
      %p315 = scmp.eq.s32.totalorder %s314, 0
      %s317 = sadd.s32 %s316, 1
      %s318 = scalar_select %p315, %s316, %s317
      %p321 = pneg %p315
      %p322 = scmp.eq.s32.totalorder %s29, 2
      %p323 = por %p321, %p322
      %p324 = scmp.ne.s32.totalorder %s316, %s319
      %p325 = scmp.eq.s32.totalorder %s29, 0
      %p326 = por %p324, %p325
      %p327 = scmp.ne.s32.totalorder %s316, %s319
      %p328 = scmp.eq.s32.totalorder %s34, 2
      %p329 = por %p327, %p328
      %p330 = scmp.ne.s32.totalorder %s319, %s320
      %p331 = scmp.eq.s32.totalorder %s34, 0
      %p332 = por %p330, %p331
      %p333 = scmp.ne.s32.totalorder %s319, %s320
      %p334 = scmp.eq.s32.totalorder %s35, 2
      %p335 = por %p333, %p334
      %p337 = scmp.ne.s32.totalorder %s320, %s336
      %p338 = scmp.eq.s32.totalorder %s35, 0
      %p339 = por %p337, %p338
      %p340 = scmp.le.s32.totalorder 1, %s29
      %p341 = scmp.lt.s32.totalorder %s29, 4
      %p342 = pnand %p340, %p341
      %p343 = pneg %p342
      // Predicated region
      $region9: #{tpu_custom_call.1} parent=5 // pred_check
        _
      $region10: #{tpu_custom_call.1} parent=5 // pred_check_branch
        %345 = sbr.rel (%p342) target = $region12
      $region11: #{tpu_custom_call.1} parent=5 // pred_region
        %s346 = ssub.s32 %s29, 1
        // Predicated region
        $region13: #{tpu_custom_call.1} parent=11 // pred_check
          %p347 = pneg %p128
        $region14: #{tpu_custom_call.1} parent=11 // pred_check_branch
          %349 = sbr.rel (%p347) target = $region16
        $region15: #{tpu_custom_call.1} parent=11 // pred_region
          _
        $region16: #{tpu_custom_call.1} parent=11 // pred_fallthru
          _
        // Predicated region
        $region17: #{tpu_custom_call.1} parent=11 // pred_check
          %p350 = pneg %p149
        $region18: #{tpu_custom_call.1} parent=11 // pred_check_branch
          %352 = sbr.rel (%p350) target = $region20
        $region19: #{tpu_custom_call.1} parent=11 // pred_region
          _
        $region20: #{tpu_custom_call.1} parent=11 // pred_fallthru
          _
        // Predicated region
        $region21: #{tpu_custom_call.1} parent=11 // pred_check
          %p353 = pneg %p170
        $region22: #{tpu_custom_call.1} parent=11 // pred_check_branch
          %355 = sbr.rel (%p353) target = $region24
        $region23: #{tpu_custom_call.1} parent=11 // pred_region
          _
        $region24: #{tpu_custom_call.1} parent=11 // pred_fallthru
          _
        // Predicated region
        $region25: #{tpu_custom_call.1} parent=11 // pred_check
          %p356 = pneg %p191
        $region26: #{tpu_custom_call.1} parent=11 // pred_check_branch
          %358 = sbr.rel (%p356) target = $region28
        $region27: #{tpu_custom_call.1} parent=11 // pred_region
          _
        $region28: #{tpu_custom_call.1} parent=11 // pred_fallthru
          _
        // Predicated region
        $region29: #{tpu_custom_call.1} parent=11 // pred_check
          %p359 = pneg %p212
        $region30: #{tpu_custom_call.1} parent=11 // pred_check_branch
          %361 = sbr.rel (%p359) target = $region32
        $region31: #{tpu_custom_call.1} parent=11 // pred_region
          _
        $region32: #{tpu_custom_call.1} parent=11 // pred_fallthru
          _
        // Predicated region
        $region33: #{tpu_custom_call.1} parent=11 // pred_check
          %p362 = pneg %p233
        $region34: #{tpu_custom_call.1} parent=11 // pred_check_branch
          %364 = sbr.rel (%p362) target = $region36
        $region35: #{tpu_custom_call.1} parent=11 // pred_region
          _
        $region36: #{tpu_custom_call.1} parent=11 // pred_fallthru
          _
        // Predicated region
        $region37: #{tpu_custom_call.1} parent=11 // pred_check
          %p365 = pneg %p254
        $region38: #{tpu_custom_call.1} parent=11 // pred_check_branch
          %367 = sbr.rel (%p365) target = $region40
        $region39: #{tpu_custom_call.1} parent=11 // pred_region
          _
        $region40: #{tpu_custom_call.1} parent=11 // pred_fallthru
          _
      $region12: #{tpu_custom_call.1} parent=5 // pred_fallthru
        _
      %p368 = scmp.lt.s32.totalorder %s29, 3
      // Predicated region
      $region41: #{tpu_custom_call.1} parent=5 // pred_check
        %p369 = pneg %p368
      $region42: #{tpu_custom_call.1} parent=5 // pred_check_branch
        %371 = sbr.rel (%p369) target = $region44
      $region43: #{tpu_custom_call.1} parent=5 // pred_region
        // Predicated region
        $region45: #{tpu_custom_call.1} parent=43 // pred_check
          %p372 = pneg %p49
        $region46: #{tpu_custom_call.1} parent=43 // pred_check_branch
          %374 = sbr.rel (%p372) target = $region48
        $region47: #{tpu_custom_call.1} parent=43 // pred_region
          %s375 = sand.u32 %s39, 1
          %s376 = scalar_lea.sflag [#allocation4], %s375
          %s377 = sand.u32 %s39, 1
          %s378 = smul.addr %s377, 32
          %s379 = scalar_lea.vmem [#allocation3], %s378
          %s381 = ssub.s32 512, 512
          %382 = vsyncadd %s376, %s381
          %s383 = smul.addr %s29, 128
          %s384 = scalar_lea.hbm %s0, %s383
          %s385 = sshll.u32 %s379, 4
          %s386 = int_to_ptr.vmem [resolvable:$true] %s385
          %391 = dma.hbm_to_vmem [thread:$0]  %s384, 512, %s386, %s376, 384, 128, 8
        $region48: #{tpu_custom_call.1} parent=43 // pred_fallthru
          _
        // Predicated region
        $region49: #{tpu_custom_call.1} parent=43 // pred_check
          %p392 = pneg %p75
        $region50: #{tpu_custom_call.1} parent=43 // pred_check_branch
          %394 = sbr.rel (%p392) target = $region52
        $region51: #{tpu_custom_call.1} parent=43 // pred_region
          %s395 = sand.u32 %s29, 1
          %s396 = scalar_lea.sflag [#allocation7], %s395
          %s397 = sand.u32 %s65, 1
          %s398 = smul.addr %s397, 32
          %s399 = scalar_lea.vmem [#allocation6], %s398
          %s401 = ssub.s32 512, 512
          %402 = vsyncadd %s396, %s401
          %s403 = smul.addr %s29, 128
          %s404 = scalar_lea.hbm %s1, %s403
          %s405 = sshll.u32 %s399, 4
          %s406 = int_to_ptr.vmem [resolvable:$true] %s405
          %411 = dma.hbm_to_vmem [thread:$0]  %s404, 512, %s406, %s396, 384, 128, 8
        $region52: #{tpu_custom_call.1} parent=43 // pred_fallthru
          _
        // Predicated region
        $region53: #{tpu_custom_call.1} parent=43 // pred_check
          %p412 = pneg %p101
        $region54: #{tpu_custom_call.1} parent=43 // pred_check_branch
          %414 = sbr.rel (%p412) target = $region56
        $region55: #{tpu_custom_call.1} parent=43 // pred_region
          %s415 = sand.u32 %s29, 1
          %s416 = scalar_lea.sflag [#allocation7], %s415
          %s417 = sand.u32 %s91, 1
          %s418 = smul.addr %s417, 32
          %s419 = scalar_lea.vmem [#allocation8], %s418
          %s421 = ssub.s32 512, 512
          %422 = vsyncadd %s416, %s421
          %s423 = smul.addr %s29, 128
          %s424 = scalar_lea.hbm %s2, %s423
          %s425 = sshll.u32 %s419, 4
          %s426 = int_to_ptr.vmem [resolvable:$true] %s425
          %431 = dma.hbm_to_vmem [thread:$0]  %s424, 512, %s426, %s416, 384, 128, 8
        $region56: #{tpu_custom_call.1} parent=43 // pred_fallthru
          _
        // Predicated region
        $region57: #{tpu_custom_call.1} parent=43 // pred_check
          %p432 = pneg %p274
        $region58: #{tpu_custom_call.1} parent=43 // pred_check_branch
          %434 = sbr.rel (%p432) target = $region60
        $region59: #{tpu_custom_call.1} parent=43 // pred_region
          %p435 = scmp.lt.s32.totalorder %s29, 2
          %s436 = scalar_select %p435, %s29, 2
          %s437 = scalar_lea.vmem %s10, %s436
        $region60: #{tpu_custom_call.1} parent=43 // pred_fallthru
          _
        // Predicated region
        $region61: #{tpu_custom_call.1} parent=43 // pred_check
          %p438 = pneg %p300
        $region62: #{tpu_custom_call.1} parent=43 // pred_check_branch
          %440 = sbr.rel (%p438) target = $region64
        $region63: #{tpu_custom_call.1} parent=43 // pred_region
          %p441 = scmp.lt.s32.totalorder %s29, 2
          %s442 = scalar_select %p441, %s29, 2
          %s443 = scalar_lea.vmem %s11, %s442
        $region64: #{tpu_custom_call.1} parent=43 // pred_fallthru
          _
      $region44: #{tpu_custom_call.1} parent=5 // pred_fallthru
        _
      %p444 = scmp.le.s32.totalorder 1, %s29
      %p445 = scmp.lt.s32.totalorder %s29, 4
      %p446 = pnand %p444, %p445
      %p447 = pneg %p446
      // Predicated region
      $region65: #{tpu_custom_call.1} parent=5 // pred_check
        _
      $region66: #{tpu_custom_call.1} parent=5 // pred_check_branch
        %449 = sbr.rel (%p446) target = $region68
      $region67: #{tpu_custom_call.1} parent=5 // pred_region
        %s450 = ssub.s32 %s29, 1
        %s451 = sand.u32 %s42, 1
        %s452 = scalar_lea.sflag [#allocation4], %s451
        %s453 = sand.u32 %s42, 1
        %s454 = smul.addr %s453, 32
        %s455 = scalar_lea.vmem [#allocation3], %s454
        // Predicated region
        $region69: #{tpu_custom_call.1} parent=67 // pred_check
          %p456 = pneg %p55
        $region70: #{tpu_custom_call.1} parent=67 // pred_check_branch
          %458 = sbr.rel (%p456) target = $region72
        $region71: #{tpu_custom_call.1} parent=67 // pred_region
          %459 = dma.done %s452, 512
        $region72: #{tpu_custom_call.1} parent=67 // pred_fallthru
          _
        %s460 = sand.u32 %s34, 1
        %s461 = scalar_lea.sflag [#allocation7], %s460
        %s462 = sand.u32 %s68, 1
        %s463 = smul.addr %s462, 32
        %s464 = scalar_lea.vmem [#allocation6], %s463
        // Predicated region
        $region73: #{tpu_custom_call.1} parent=67 // pred_check
          %p465 = pneg %p81
        $region74: #{tpu_custom_call.1} parent=67 // pred_check_branch
          %467 = sbr.rel (%p465) target = $region76
        $region75: #{tpu_custom_call.1} parent=67 // pred_region
          %468 = dma.done %s461, 512
        $region76: #{tpu_custom_call.1} parent=67 // pred_fallthru
          _
        %s469 = sand.u32 %s34, 1
        %s470 = scalar_lea.sflag [#allocation7], %s469
        %s471 = sand.u32 %s94, 1
        %s472 = smul.addr %s471, 32
        %s473 = scalar_lea.vmem [#allocation8], %s472
        // Predicated region
        $region77: #{tpu_custom_call.1} parent=67 // pred_check
          %p474 = pneg %p107
        $region78: #{tpu_custom_call.1} parent=67 // pred_check_branch
          %476 = sbr.rel (%p474) target = $region80
        $region79: #{tpu_custom_call.1} parent=67 // pred_region
          %477 = dma.done %s470, 512
        $region80: #{tpu_custom_call.1} parent=67 // pred_fallthru
          _
        %s478 = sand.u32 %s42, 1
        %s479 = scalar_lea.sflag [#allocation4], %s478
        %s480 = sand.u32 %s42, 1
        %s481 = smul.addr %s480, 32
        %s482 = scalar_lea.vmem [#allocation3], %s481
        %p483 = pneg %p55
        %p484 = pneg %p52
        %s485 = sand.u32 %s34, 1
        %s486 = scalar_lea.sflag [#allocation7], %s485
        %s487 = sand.u32 %s68, 1
        %s488 = smul.addr %s487, 32
        %s489 = scalar_lea.vmem [#allocation6], %s488
        %p490 = pneg %p81
        %p491 = pneg %p78
        %s492 = sand.u32 %s34, 1
        %s493 = scalar_lea.sflag [#allocation7], %s492
        %s494 = sand.u32 %s94, 1
        %s495 = smul.addr %s494, 32
        %s496 = scalar_lea.vmem [#allocation8], %s495
        %p497 = pneg %p107
        %p498 = pneg %p104
        %p499 = pneg %p128
        %p500 = pneg %p125
        %p501 = pneg %p149
        %p502 = pneg %p146
        %p503 = pneg %p170
        %p504 = pneg %p167
        %p505 = pneg %p191
        %p506 = pneg %p188
        %p507 = pneg %p212
        %p508 = pneg %p209
        %p509 = pneg %p233
        %p510 = pneg %p230
        %p511 = pneg %p254
        %p512 = pneg %p251
        %p513 = scmp.lt.s32.totalorder %s34, 2
        %s514 = scalar_select %p513, %s34, 2
        %s515 = scalar_lea.vmem %s10, %s514
        %p516 = pneg %p280
        %p517 = pneg %p277
        %p518 = scmp.lt.s32.totalorder %s34, 2
        %s519 = scalar_select %p518, %s34, 2
        %s520 = scalar_lea.vmem %s11, %s519
        %p521 = pneg %p306
        %p522 = pneg %p303
        %p523 = pneg %p332
        %p524 = pneg %p329
        %s525 = sand.u32 %s319, 1
        %s526 = scalar_lea.sflag [#allocation5], %s525
        %s527 = sand.u32 %s319, 1
        %s528 = scalar_lea.vmem [#allocation9], %s527
        %p529 = scmp.lt.s32.totalorder %s34, 2
        %s530 = scalar_select %p529, %s34, 2
        %s531 = scalar_lea.vmem %s10, %s530
        %p532 = scmp.lt.s32.totalorder %s34, 2
        %s533 = scalar_select %p532, %s34, 2
        %s534 = scalar_lea.vmem %s11, %s533
        %v535 = vld [vmem:[%s473] sm:$0xff]
        %v536 = vld [vmem:[%s473 + $0x8] sm:$0xff]
        %v537 = vld [vmem:[%s473 + $0x10] sm:$0xff]
        %v538 = vld [vmem:[%s473 + $0x18] sm:$0xff]
        %v539 = vld [vmem:[%s4] sm:$0xff]
        %v540 = vld [vmem:[%s4 + $0x8] sm:$0xff]
        %v541 = vld [vmem:[%s4 + $0x10] sm:$0xff]
        %v542 = vld [vmem:[%s4 + $0x18] sm:$0xff]
        %v543 = vld [vmem:[%s5] sm:$0xff]
        %v544 = vld [vmem:[%s5 + $0x8] sm:$0xff]
        %v545 = vld [vmem:[%s5 + $0x10] sm:$0xff]
        %v546 = vld [vmem:[%s5 + $0x18] sm:$0xff]
        %548 = vset.pattern.permute.xlu0 0
        %549 = vperm.xlu0 %548, %v543
        %v550 = vpop.permute.xlu0 %549
        %553 = vset.pattern.permute.xlu0 0
        %554 = vperm.xlu0 %553, %v544
        %v555 = vpop.permute.xlu0 %554
        %558 = vset.pattern.permute.xlu0 0
        %559 = vperm.xlu0 %558, %v545
        %v560 = vpop.permute.xlu0 %559
        %563 = vset.pattern.permute.xlu0 0
        %564 = vperm.xlu0 %563, %v546
        %v565 = vpop.permute.xlu0 %564
        %vm567 = vcmask 261120
        %v569 = vsel %vm567, %v539, 0
        %v572 = vsel %vm567, %v540, 0
        %v575 = vsel %vm567, %v541, 0
        %v578 = vsel %vm567, %v542, 0
        %580 = vmatprep.subr.mxu0 0.0
        %581 = vmatpush1.msra.mxu0 %v535
        %582 = vmatprep.subr.mxu0 0.0
        %583 = vmatpush1.msra.mxu0 %v536
        %584 = vmatprep.subr.mxu0 0.0
        %585 = vmatpush1.msra.mxu0 %v537
        %586 = vmatprep.subr.mxu0 0.0
        %587 = vmatpush1.msra.mxu0 %v538
        %588 = vmatprep.subr.mxu0 0.0
        %589 = vmatpush1.msra.mxu0 0.0
        %590 = vmatprep.subr.mxu0 0.0
        %591 = vmatpush1.msra.mxu0 0.0
        %592 = vmatprep.subr.mxu0 0.0
        %593 = vmatpush1.msra.mxu0 0.0
        %594 = vmatprep.subr.mxu0 0.0
        %595 = vmatpush1.msra.mxu0 0.0
        %596 = vmatprep.subr.mxu0 0.0
        %597 = vmatpush1.msra.mxu0 0.0
        %598 = vmatprep.subr.mxu0 0.0
        %599 = vmatpush1.msra.mxu0 0.0
        %600 = vmatprep.subr.mxu0 0.0
        %601 = vmatpush1.msra.mxu0 0.0
        %602 = vmatprep.subr.mxu0 0.0
        %603 = vmatpush1.msra.mxu0 0.0
        %604 = vmatprep.subr.mxu0 0.0
        %605 = vmatpush1.msra.mxu0 0.0
        %606 = vmatprep.subr.mxu0 0.0
        %607 = vmatpush1.msra.mxu0 0.0
        %608 = vmatprep.subr.mxu0 0.0
        %609 = vmatpush1.msra.mxu0 0.0
        %610 = vmatprep.subr.mxu0 0.0
        %611 = vmatpush1.msra.mxu0 0.0
        %612 = vmatprep.subr.mxu0 0.0
        %613 = vmatpush1.msra.mxu0 0.0
        %614 = vmatprep.subr.mxu0 0.0
        %615 = vmatpush1.msra.mxu0 0.0
        %616 = vmatprep.subr.mxu0 0.0
        %617 = vmatpush1.msra.mxu0 0.0
        %618 = vmatprep.subr.mxu0 0.0
        %619 = vmatpush1.msra.mxu0 0.0
        %620 = vmatprep.subr.mxu0 0.0
        %621 = vmatpush1.msra.mxu0 0.0
        %622 = vmatprep.subr.mxu0 0.0
        %623 = vmatpush1.msra.mxu0 0.0
        %624 = vmatprep.subr.mxu0 0.0
        %625 = vmatpush1.msra.mxu0 0.0
        %626 = vmatprep.subr.mxu0 0.0
        %627 = vmatpush1.msra.mxu0 0.0
        %628 = vmatprep.subr.mxu0 0.0
        %629 = vmatpush1.msra.mxu0 0.0
        %630 = vmatprep.subr.mxu0 0.0
        %631 = vmatpush1.msra.mxu0 0.0
        %632 = vmatprep.subr.mxu0 0.0
        %633 = vmatpush1.msra.mxu0 0.0
        %634 = vmatprep.subr.mxu0 0.0
        %635 = vmatpush1.msra.mxu0 0.0
        %636 = vmatprep.subr.mxu0 0.0
        %637 = vmatpush1.msra.mxu0 0.0
        %638 = vmatprep.subr.mxu0 0.0
        %639 = vmatpush1.msra.mxu0 0.0
        %640 = vmatprep.subr.mxu0 0.0
        %641 = vmatpush1.msra.mxu0 0.0
        %642 = vmatprep.subr.mxu0 0.0
        %643 = vmatpush1.msra.mxu0 0.0
        %644 = vmatprep.mubr.f32.mxu0 0.0
        %645 = vmatmul.mubr.f32.gmra.mrb[0].mxu0 %v569
        %v646 = vpop.f32.mrb[0].mxu0
        %v647 = vadd.f32 %v550, %v646
        %v648 = vpop.f32.mrb[0].mxu0
        %649 = vmatprep.mubr.f32.mxu0 0.0
        %650 = vmatmul.mubr.f32.gmra.mrb[0].mxu0 %v572
        %v651 = vpop.f32.mrb[0].mxu0
        %v652 = vadd.f32 %v555, %v651
        %v653 = vpop.f32.mrb[0].mxu0
        %654 = vmatprep.mubr.f32.mxu0 0.0
        %655 = vmatmul.mubr.f32.gmra.mrb[0].mxu0 %v575
        %v656 = vpop.f32.mrb[0].mxu0
        %v657 = vadd.f32 %v560, %v656
        %v658 = vpop.f32.mrb[0].mxu0
        %659 = vmatprep.mubr.f32.mxu0 0.0
        %660 = vmatmul.mubr.f32.gmra.mrb[0].mxu0 %v578
        %v661 = vpop.f32.mrb[0].mxu0
        %v662 = vadd.f32 %v565, %v661
        %v663 = vpop.f32.mrb[0].mxu0
        %664 = vdwg.mxu0
        %v665 = vxor.u32 %v647, 2147483648
        %v666 = vxor.u32 %v652, 2147483648
        %v667 = vxor.u32 %v657, 2147483648
        %v668 = vxor.u32 %v662, 2147483648
        %v669 = vmul.f32 %v665, 1.442695
        %v670 = vpow.pop %v669
        %v671 = vmul.f32 %v666, 1.442695
        %v672 = vpow.pop %v671
        %v673 = vmul.f32 %v667, 1.442695
        %v674 = vpow.pop %v673
        %v675 = vmul.f32 %v668, 1.442695
        %v676 = vpow.pop %v675
        %v677 = vadd.f32 %v670, 1.0
        %v678 = vadd.f32 %v672, 1.0
        %v679 = vadd.f32 %v674, 1.0
        %v680 = vadd.f32 %v676, 1.0
        %v681 = vrcp.pop %v677
        %v682 = vmul.f32 1.0, %v681
        %v683 = vrcp.pop %v678
        %v684 = vmul.f32 1.0, %v683
        %v685 = vrcp.pop %v679
        %v686 = vmul.f32 1.0, %v685
        %v687 = vrcp.pop %v680
        %v688 = vmul.f32 1.0, %v687
        %v689 = vmul.f32 %v647, %v682
        %v690 = vmul.f32 %v652, %v684
        %v691 = vmul.f32 %v657, %v686
        %v692 = vmul.f32 %v662, %v688
        %v693 = vld [vmem:[%s6] sm:$0xff]
        %v694 = vld [vmem:[%s6 + $0x8] sm:$0xff]
        %v695 = vld [vmem:[%s6 + $0x10] sm:$0xff]
        %v696 = vld [vmem:[%s6 + $0x18] sm:$0xff]
        %v697 = vld [vmem:[%s7] sm:$0xff]
        %v698 = vld [vmem:[%s7 + $0x8] sm:$0xff]
        %v699 = vld [vmem:[%s7 + $0x10] sm:$0xff]
        %v700 = vld [vmem:[%s7 + $0x18] sm:$0xff]
        %702 = vset.pattern.permute.xlu0 0
        %703 = vperm.xlu0 %702, %v697
        %v704 = vpop.permute.xlu0 %703
        %707 = vset.pattern.permute.xlu0 0
        %708 = vperm.xlu0 %707, %v698
        %v709 = vpop.permute.xlu0 %708
        %712 = vset.pattern.permute.xlu0 0
        %713 = vperm.xlu0 %712, %v699
        %v714 = vpop.permute.xlu0 %713
        %717 = vset.pattern.permute.xlu0 0
        %718 = vperm.xlu0 %717, %v700
        %v719 = vpop.permute.xlu0 %718
        %v722 = vsel %vm567, %v693, 0
        %v725 = vsel %vm567, %v694, 0
        %v728 = vsel %vm567, %v695, 0
        %v731 = vsel %vm567, %v696, 0
        %733 = vmatprep.subr.mxu0 0.0
        %734 = vmatpush1.msra.mxu0 %v689
        %735 = vmatprep.subr.mxu0 0.0
        %736 = vmatpush1.msra.mxu0 %v690
        %737 = vmatprep.subr.mxu0 0.0
        %738 = vmatpush1.msra.mxu0 %v691
        %739 = vmatprep.subr.mxu0 0.0
        %740 = vmatpush1.msra.mxu0 %v692
        %741 = vmatprep.subr.mxu0 0.0
        %742 = vmatpush1.msra.mxu0 0.0
        %743 = vmatprep.subr.mxu0 0.0
        %744 = vmatpush1.msra.mxu0 0.0
        %745 = vmatprep.subr.mxu0 0.0
        %746 = vmatpush1.msra.mxu0 0.0
        %747 = vmatprep.subr.mxu0 0.0
        %748 = vmatpush1.msra.mxu0 0.0
        %749 = vmatprep.subr.mxu0 0.0
        %750 = vmatpush1.msra.mxu0 0.0
        %751 = vmatprep.subr.mxu0 0.0
        %752 = vmatpush1.msra.mxu0 0.0
        %753 = vmatprep.subr.mxu0 0.0
        %754 = vmatpush1.msra.mxu0 0.0
        %755 = vmatprep.subr.mxu0 0.0
        %756 = vmatpush1.msra.mxu0 0.0
        %757 = vmatprep.subr.mxu0 0.0
        %758 = vmatpush1.msra.mxu0 0.0
        %759 = vmatprep.subr.mxu0 0.0
        %760 = vmatpush1.msra.mxu0 0.0
        %761 = vmatprep.subr.mxu0 0.0
        %762 = vmatpush1.msra.mxu0 0.0
        %763 = vmatprep.subr.mxu0 0.0
        %764 = vmatpush1.msra.mxu0 0.0
        %765 = vmatprep.subr.mxu0 0.0
        %766 = vmatpush1.msra.mxu0 0.0
        %767 = vmatprep.subr.mxu0 0.0
        %768 = vmatpush1.msra.mxu0 0.0
        %769 = vmatprep.subr.mxu0 0.0
        %770 = vmatpush1.msra.mxu0 0.0
        %771 = vmatprep.subr.mxu0 0.0
        %772 = vmatpush1.msra.mxu0 0.0
        %773 = vmatprep.subr.mxu0 0.0
        %774 = vmatpush1.msra.mxu0 0.0
        %775 = vmatprep.subr.mxu0 0.0
        %776 = vmatpush1.msra.mxu0 0.0
        %777 = vmatprep.subr.mxu0 0.0
        %778 = vmatpush1.msra.mxu0 0.0
        %779 = vmatprep.subr.mxu0 0.0
        %780 = vmatpush1.msra.mxu0 0.0
        %781 = vmatprep.subr.mxu0 0.0
        %782 = vmatpush1.msra.mxu0 0.0
        %783 = vmatprep.subr.mxu0 0.0
        %784 = vmatpush1.msra.mxu0 0.0
        %785 = vmatprep.subr.mxu0 0.0
        %786 = vmatpush1.msra.mxu0 0.0
        %787 = vmatprep.subr.mxu0 0.0
        %788 = vmatpush1.msra.mxu0 0.0
        %789 = vmatprep.subr.mxu0 0.0
        %790 = vmatpush1.msra.mxu0 0.0
        %791 = vmatprep.subr.mxu0 0.0
        %792 = vmatpush1.msra.mxu0 0.0
        %793 = vmatprep.subr.mxu0 0.0
        %794 = vmatpush1.msra.mxu0 0.0
        %795 = vmatprep.subr.mxu0 0.0
        %796 = vmatpush1.msra.mxu0 0.0
        %797 = vmatprep.mubr.f32.mxu0 0.0
        %798 = vmatmul.mubr.f32.gmra.mrb[0].mxu0 %v722
        %v799 = vpop.f32.mrb[0].mxu0
        %v800 = vadd.f32 %v704, %v799
        %v801 = vpop.f32.mrb[0].mxu0
        %802 = vmatprep.mubr.f32.mxu0 0.0
        %803 = vmatmul.mubr.f32.gmra.mrb[0].mxu0 %v725
        %v804 = vpop.f32.mrb[0].mxu0
        %v805 = vadd.f32 %v709, %v804
        %v806 = vpop.f32.mrb[0].mxu0
        %807 = vmatprep.mubr.f32.mxu0 0.0
        %808 = vmatmul.mubr.f32.gmra.mrb[0].mxu0 %v728
        %v809 = vpop.f32.mrb[0].mxu0
        %v810 = vadd.f32 %v714, %v809
        %v811 = vpop.f32.mrb[0].mxu0
        %812 = vmatprep.mubr.f32.mxu0 0.0
        %813 = vmatmul.mubr.f32.gmra.mrb[0].mxu0 %v731
        %v814 = vpop.f32.mrb[0].mxu0
        %v815 = vadd.f32 %v719, %v814
        %v816 = vpop.f32.mrb[0].mxu0
        %817 = vdwg.mxu0
        %v818 = vxor.u32 %v800, 2147483648
        %v819 = vxor.u32 %v805, 2147483648
        %v820 = vxor.u32 %v810, 2147483648
        %v821 = vxor.u32 %v815, 2147483648
        %v822 = vmul.f32 %v818, 1.442695
        %v823 = vpow.pop %v822
        %v824 = vmul.f32 %v819, 1.442695
        %v825 = vpow.pop %v824
        %v826 = vmul.f32 %v820, 1.442695
        %v827 = vpow.pop %v826
        %v828 = vmul.f32 %v821, 1.442695
        %v829 = vpow.pop %v828
        %v830 = vadd.f32 %v823, 1.0
        %v831 = vadd.f32 %v825, 1.0
        %v832 = vadd.f32 %v827, 1.0
        %v833 = vadd.f32 %v829, 1.0
        %v834 = vrcp.pop %v830
        %v835 = vmul.f32 1.0, %v834
        %v836 = vrcp.pop %v831
        %v837 = vmul.f32 1.0, %v836
        %v838 = vrcp.pop %v832
        %v839 = vmul.f32 1.0, %v838
        %v840 = vrcp.pop %v833
        %v841 = vmul.f32 1.0, %v840
        %v842 = vmul.f32 %v800, %v835
        %v843 = vmul.f32 %v805, %v837
        %v844 = vmul.f32 %v810, %v839
        %v845 = vmul.f32 %v815, %v841
        %v846 = vld [vmem:[%s8] sm:$0x1]
        %v847 = vld [vmem:[#allocation2] sm:$0x1]
        %849 = vset.pattern.permute.xlu0 0
        %850 = vperm.xlu0 %849, %v847
        %v851 = vpop.permute.xlu0 %850
        %v853 = vlaneseq
        %v854 = vshrl.u32 %v853, 7
        %v855 = vsub.s32 0, %v854
        %v856 = vrot.slane %v851, %v855
        %v858 = vsel %vm567, %v846, 0
        %860 = vmatprep.subr.mxu0 0.0
        %861 = vmatpush1.msra.mxu0 %v842
        %862 = vmatprep.subr.mxu0 0.0
        %863 = vmatpush1.msra.mxu0 %v843
        %864 = vmatprep.subr.mxu0 0.0
        %865 = vmatpush1.msra.mxu0 %v844
        %866 = vmatprep.subr.mxu0 0.0
        %867 = vmatpush1.msra.mxu0 %v845
        %868 = vmatprep.subr.mxu0 0.0
        %869 = vmatpush1.msra.mxu0 0.0
        %870 = vmatprep.subr.mxu0 0.0
        %871 = vmatpush1.msra.mxu0 0.0
        %872 = vmatprep.subr.mxu0 0.0
        %873 = vmatpush1.msra.mxu0 0.0
        %874 = vmatprep.subr.mxu0 0.0
        %875 = vmatpush1.msra.mxu0 0.0
        %876 = vmatprep.subr.mxu0 0.0
        %877 = vmatpush1.msra.mxu0 0.0
        %878 = vmatprep.subr.mxu0 0.0
        %879 = vmatpush1.msra.mxu0 0.0
        %880 = vmatprep.subr.mxu0 0.0
        %881 = vmatpush1.msra.mxu0 0.0
        %882 = vmatprep.subr.mxu0 0.0
        %883 = vmatpush1.msra.mxu0 0.0
        %884 = vmatprep.subr.mxu0 0.0
        %885 = vmatpush1.msra.mxu0 0.0
        %886 = vmatprep.subr.mxu0 0.0
        %887 = vmatpush1.msra.mxu0 0.0
        %888 = vmatprep.subr.mxu0 0.0
        %889 = vmatpush1.msra.mxu0 0.0
        %890 = vmatprep.subr.mxu0 0.0
        %891 = vmatpush1.msra.mxu0 0.0
        %892 = vmatprep.subr.mxu0 0.0
        %893 = vmatpush1.msra.mxu0 0.0
        %894 = vmatprep.subr.mxu0 0.0
        %895 = vmatpush1.msra.mxu0 0.0
        %896 = vmatprep.subr.mxu0 0.0
        %897 = vmatpush1.msra.mxu0 0.0
        %898 = vmatprep.subr.mxu0 0.0
        %899 = vmatpush1.msra.mxu0 0.0
        %900 = vmatprep.subr.mxu0 0.0
        %901 = vmatpush1.msra.mxu0 0.0
        %902 = vmatprep.subr.mxu0 0.0
        %903 = vmatpush1.msra.mxu0 0.0
        %904 = vmatprep.subr.mxu0 0.0
        %905 = vmatpush1.msra.mxu0 0.0
        %906 = vmatprep.subr.mxu0 0.0
        %907 = vmatpush1.msra.mxu0 0.0
        %908 = vmatprep.subr.mxu0 0.0
        %909 = vmatpush1.msra.mxu0 0.0
        %910 = vmatprep.subr.mxu0 0.0
        %911 = vmatpush1.msra.mxu0 0.0
        %912 = vmatprep.subr.mxu0 0.0
        %913 = vmatpush1.msra.mxu0 0.0
        %914 = vmatprep.subr.mxu0 0.0
        %915 = vmatpush1.msra.mxu0 0.0
        %916 = vmatprep.subr.mxu0 0.0
        %917 = vmatpush1.msra.mxu0 0.0
        %918 = vmatprep.subr.mxu0 0.0
        %919 = vmatpush1.msra.mxu0 0.0
        %920 = vmatprep.subr.mxu0 0.0
        %921 = vmatpush1.msra.mxu0 0.0
        %922 = vmatprep.subr.mxu0 0.0
        %923 = vmatpush1.msra.mxu0 0.0
        %924 = vmatprep.mubr.f32.mxu0 0.0
        %925 = vmatmul.mubr.f32.gmra.mrb[0].mxu0 %v858
        %v926 = vpop.f32.mrb[0].mxu0
        %v927 = vadd.f32 %v856, %v926
        %v928 = vpop.f32.mrb[0].mxu0
        %929 = vdwg.mxu0
        %v930 = vld [vmem:[%s3] sm:$0x3]
        %v931 = vld [vmem:[%s455] sm:$0xff]
        %v932 = vld [vmem:[%s455 + $0x8] sm:$0xff]
        %v933 = vld [vmem:[%s455 + $0x10] sm:$0xff]
        %v934 = vld [vmem:[%s455 + $0x18] sm:$0xff]
        %v936 = vsel %vm567, %v930, 0
        %938 = vmatprep.subr.mxu0 0.0
        %939 = vmatpush1.msra.mxu0 %v931
        %940 = vmatprep.subr.mxu0 0.0
        %941 = vmatpush1.msra.mxu0 %v932
        %942 = vmatprep.subr.mxu0 0.0
        %943 = vmatpush1.msra.mxu0 %v933
        %944 = vmatprep.subr.mxu0 0.0
        %945 = vmatpush1.msra.mxu0 %v934
        %946 = vmatprep.subr.mxu0 0.0
        %947 = vmatpush1.msra.mxu0 0.0
        %948 = vmatprep.subr.mxu0 0.0
        %949 = vmatpush1.msra.mxu0 0.0
        %950 = vmatprep.subr.mxu0 0.0
        %951 = vmatpush1.msra.mxu0 0.0
        %952 = vmatprep.subr.mxu0 0.0
        %953 = vmatpush1.msra.mxu0 0.0
        %954 = vmatprep.subr.mxu0 0.0
        %955 = vmatpush1.msra.mxu0 0.0
        %956 = vmatprep.subr.mxu0 0.0
        %957 = vmatpush1.msra.mxu0 0.0
        %958 = vmatprep.subr.mxu0 0.0
        %959 = vmatpush1.msra.mxu0 0.0
        %960 = vmatprep.subr.mxu0 0.0
        %961 = vmatpush1.msra.mxu0 0.0
        %962 = vmatprep.subr.mxu0 0.0
        %963 = vmatpush1.msra.mxu0 0.0
        %964 = vmatprep.subr.mxu0 0.0
        %965 = vmatpush1.msra.mxu0 0.0
        %966 = vmatprep.subr.mxu0 0.0
        %967 = vmatpush1.msra.mxu0 0.0
        %968 = vmatprep.subr.mxu0 0.0
        %969 = vmatpush1.msra.mxu0 0.0
        %970 = vmatprep.subr.mxu0 0.0
        %971 = vmatpush1.msra.mxu0 0.0
        %972 = vmatprep.subr.mxu0 0.0
        %973 = vmatpush1.msra.mxu0 0.0
        %974 = vmatprep.subr.mxu0 0.0
        %975 = vmatpush1.msra.mxu0 0.0
        %976 = vmatprep.subr.mxu0 0.0
        %977 = vmatpush1.msra.mxu0 0.0
        %978 = vmatprep.subr.mxu0 0.0
        %979 = vmatpush1.msra.mxu0 0.0
        %980 = vmatprep.subr.mxu0 0.0
        %981 = vmatpush1.msra.mxu0 0.0
        %982 = vmatprep.subr.mxu0 0.0
        %983 = vmatpush1.msra.mxu0 0.0
        %984 = vmatprep.subr.mxu0 0.0
        %985 = vmatpush1.msra.mxu0 0.0
        %986 = vmatprep.subr.mxu0 0.0
        %987 = vmatpush1.msra.mxu0 0.0
        %988 = vmatprep.subr.mxu0 0.0
        %989 = vmatpush1.msra.mxu0 0.0
        %990 = vmatprep.subr.mxu0 0.0
        %991 = vmatpush1.msra.mxu0 0.0
        %992 = vmatprep.subr.mxu0 0.0
        %993 = vmatpush1.msra.mxu0 0.0
        %994 = vmatprep.subr.mxu0 0.0
        %995 = vmatpush1.msra.mxu0 0.0
        %996 = vmatprep.subr.mxu0 0.0
        %997 = vmatpush1.msra.mxu0 0.0
        %998 = vmatprep.subr.mxu0 0.0
        %999 = vmatpush1.msra.mxu0 0.0
        %1000 = vmatprep.subr.mxu0 0.0
        %1001 = vmatpush1.msra.mxu0 0.0
        %1002 = vmatprep.mubr.f32.mxu0 0.0
        %1003 = vmatmul.mubr.f32.gmra.mrb[0].mxu0 %v936
        %v1004 = vpop.f32.mrb[0].mxu0
        %v1005 = vadd.f32 0.0, %v1004
        %v1006 = vpop.f32.mrb[0].mxu0
        %1007 = vdwg.mxu0
        %v1008 = vadd.f32 %v927, %v1005
        %v1009 = vld [vmem:[%s464] sm:$0xff]
        %v1010 = vld [vmem:[%s464 + $0x8] sm:$0xff]
        %v1011 = vld [vmem:[%s464 + $0x10] sm:$0xff]
        %v1012 = vld [vmem:[%s464 + $0x18] sm:$0xff]
        %v1013 = vrot.slane %v930, 1
        %v1014 = vsel %vm567, %v1013, 0
        %1016 = vmatprep.subr.mxu0 0.0
        %1017 = vmatpush1.msra.mxu0 %v1009
        %1018 = vmatprep.subr.mxu0 0.0
        %1019 = vmatpush1.msra.mxu0 %v1010
        %1020 = vmatprep.subr.mxu0 0.0
        %1021 = vmatpush1.msra.mxu0 %v1011
        %1022 = vmatprep.subr.mxu0 0.0
        %1023 = vmatpush1.msra.mxu0 %v1012
        %1024 = vmatprep.subr.mxu0 0.0
        %1025 = vmatpush1.msra.mxu0 0.0
        %1026 = vmatprep.subr.mxu0 0.0
        %1027 = vmatpush1.msra.mxu0 0.0
        %1028 = vmatprep.subr.mxu0 0.0
        %1029 = vmatpush1.msra.mxu0 0.0
        %1030 = vmatprep.subr.mxu0 0.0
        %1031 = vmatpush1.msra.mxu0 0.0
        %1032 = vmatprep.subr.mxu0 0.0
        %1033 = vmatpush1.msra.mxu0 0.0
        %1034 = vmatprep.subr.mxu0 0.0
        %1035 = vmatpush1.msra.mxu0 0.0
        %1036 = vmatprep.subr.mxu0 0.0
        %1037 = vmatpush1.msra.mxu0 0.0
        %1038 = vmatprep.subr.mxu0 0.0
        %1039 = vmatpush1.msra.mxu0 0.0
        %1040 = vmatprep.subr.mxu0 0.0
        %1041 = vmatpush1.msra.mxu0 0.0
        %1042 = vmatprep.subr.mxu0 0.0
        %1043 = vmatpush1.msra.mxu0 0.0
        %1044 = vmatprep.subr.mxu0 0.0
        %1045 = vmatpush1.msra.mxu0 0.0
        %1046 = vmatprep.subr.mxu0 0.0
        %1047 = vmatpush1.msra.mxu0 0.0
        %1048 = vmatprep.subr.mxu0 0.0
        %1049 = vmatpush1.msra.mxu0 0.0
        %1050 = vmatprep.subr.mxu0 0.0
        %1051 = vmatpush1.msra.mxu0 0.0
        %1052 = vmatprep.subr.mxu0 0.0
        %1053 = vmatpush1.msra.mxu0 0.0
        %1054 = vmatprep.subr.mxu0 0.0
        %1055 = vmatpush1.msra.mxu0 0.0
        %1056 = vmatprep.subr.mxu0 0.0
        %1057 = vmatpush1.msra.mxu0 0.0
        %1058 = vmatprep.subr.mxu0 0.0
        %1059 = vmatpush1.msra.mxu0 0.0
        %1060 = vmatprep.subr.mxu0 0.0
        %1061 = vmatpush1.msra.mxu0 0.0
        %1062 = vmatprep.subr.mxu0 0.0
        %1063 = vmatpush1.msra.mxu0 0.0
        %1064 = vmatprep.subr.mxu0 0.0
        %1065 = vmatpush1.msra.mxu0 0.0
        %1066 = vmatprep.subr.mxu0 0.0
        %1067 = vmatpush1.msra.mxu0 0.0
        %1068 = vmatprep.subr.mxu0 0.0
        %1069 = vmatpush1.msra.mxu0 0.0
        %1070 = vmatprep.subr.mxu0 0.0
        %1071 = vmatpush1.msra.mxu0 0.0
        %1072 = vmatprep.subr.mxu0 0.0
        %1073 = vmatpush1.msra.mxu0 0.0
        %1074 = vmatprep.subr.mxu0 0.0
        %1075 = vmatpush1.msra.mxu0 0.0
        %1076 = vmatprep.subr.mxu0 0.0
        %1077 = vmatpush1.msra.mxu0 0.0
        %1078 = vmatprep.subr.mxu0 0.0
        %1079 = vmatpush1.msra.mxu0 0.0
        %1080 = vmatprep.mubr.f32.mxu0 0.0
        %1081 = vmatmul.mubr.f32.gmra.mrb[0].mxu0 %v1014
        %v1082 = vpop.f32.mrb[0].mxu0
        %v1083 = vadd.f32 0.0, %v1082
        %v1084 = vpop.f32.mrb[0].mxu0
        %1085 = vdwg.mxu0
        %v1086 = vadd.f32 %v1008, %v1083
        %v1087 = vld [vmem:[%s531] sm:$0x1]
        %v1088 = vmul.f32 %v1086, %v1087
        %v1089 = vld [vmem:[%s534] sm:$0x1]
        %v1090 = vadd.f32 %v1088, %v1089
        %1091 = vst [vmem:[%s528] sm:$0x1] %v1090
        %s1092 = sand.u32 %s319, 1
        %s1093 = scalar_lea.sflag [#allocation5], %s1092
        %s1094 = sand.u32 %s319, 1
        %s1095 = scalar_lea.vmem [#allocation9], %s1094
        // Predicated region
        $region81: #{tpu_custom_call.1} parent=67 // pred_check
          %p1096 = pneg %p329
        $region82: #{tpu_custom_call.1} parent=67 // pred_check_branch
          %1098 = sbr.rel (%p1096) target = $region84
        $region83: #{tpu_custom_call.1} parent=67 // pred_region
          %s1100 = ssub.s32 16, 16
          %1101 = vsyncadd %s1093, %s1100
          %s1102 = smul.addr %s34, 16
          %s1103 = scalar_lea.hbm %s12, %s1102
          %s1105 = sshll.u32 %s1095, 4
          %s1106 = int_to_ptr.vmem [resolvable:$true] %s1105
          %1108 = dma.vmem_to_hbm [thread:$0]  %s1106, 16, %s1103, %s1093
        $region84: #{tpu_custom_call.1} parent=67 // pred_fallthru
          _
      $region68: #{tpu_custom_call.1} parent=5 // pred_fallthru
        _
      %p1109 = scmp.le.s32.totalorder 2, %s29
      // Predicated region
      $region85: #{tpu_custom_call.1} parent=5 // pred_check
        %p1110 = pneg %p1109
      $region86: #{tpu_custom_call.1} parent=5 // pred_check_branch
        %1112 = sbr.rel (%p1110) target = $region88
      $region87: #{tpu_custom_call.1} parent=5 // pred_region
        %s1113 = ssub.s32 %s29, 2
        // Predicated region
        $region89: #{tpu_custom_call.1} parent=87 // pred_check
          %p1114 = pneg %p335
        $region90: #{tpu_custom_call.1} parent=87 // pred_check_branch
          %1116 = sbr.rel (%p1114) target = $region92
        $region91: #{tpu_custom_call.1} parent=87 // pred_region
          %s1117 = sand.u32 %s320, 1
          %s1118 = scalar_lea.sflag [#allocation5], %s1117
          %s1119 = sand.u32 %s320, 1
          %s1120 = scalar_lea.vmem [#allocation9], %s1119
          %1121 = dma.done %s1118, 16
        $region92: #{tpu_custom_call.1} parent=87 // pred_fallthru
          _
      $region88: #{tpu_custom_call.1} parent=5 // pred_fallthru
        _
    $region6: #{tpu_custom_call.1} parent=1 // loop_footer
      %s33 = sadd.s32 1, %s29
    $region7: #{tpu_custom_call.1} parent=1 // loop_footer_branch
      %28 = sbr.rel target = $region3
    $region8: #{tpu_custom_call.1} parent=1 // loop_exit
      _
    %1122 = vsyncpa [#allocation4], 1
    %s1123 = scalar_lea.sflag [#allocation4], 1
    %1124 = vsyncpa %s1123, 1
    %1125 = vsyncpa [#allocation7], 1
    %s1126 = scalar_lea.sflag [#allocation7], 1
    %1127 = vsyncpa %s1126, 1
    %1128 = vsyncpa [#allocation5], 1
    %s1129 = scalar_lea.sflag [#allocation5], 1
    %1130 = vsyncpa %s1129, 1

</llo_original>
